<compile_context>
chip_gen: v5e
topology: v5e:2x2
jax: 0.10.0
libtpu: 0.0.40
codegen_flags: <defaults>
</compile_context>

<pallas_src>
import math
from typing import NamedTuple

import jax
import jax.numpy as jnp
from jax.experimental import pallas as pl
from jax.experimental.pallas import tpu as pltpu


def _round_up(x, m):
    return (x + m - 1) // m * m


def _cdiv(a, b):
    return (a + b - 1) // b


def _vmem_capacity_bytes():
    """Per-core VMEM capacity; conservative 64 MiB (v7x) if the query fails."""
    try:
        info = pltpu.get_tpu_info()
        cap = getattr(info, "vmem_capacity_bytes", None)
        if cap:
            return int(cap)
    except Exception:
        pass
    return 64 << 20


def _pick_tn(cap_cols, n_pad):
    """Largest tn <= cap_cols dividing n_pad; 256-aligned preferred (v6e/v7x MXU)."""
    if cap_cols <= 0:
        return 0
    if cap_cols >= n_pad:
        return n_pad
    best = 0
    for align in (256, 128):
        if n_pad % align:
            continue
        tn = (cap_cols // align) * align
        while tn >= align and n_pad % tn:
            tn -= align
        if tn >= align:
            best = max(best, tn)
    return best


def _select_tiles(M_pad, tm, K_pad, N_pad, r_pad, c_bytes, o_bytes, budget):
    """Pick (tk, tn, working_set_bytes) so double-buffered tiles fit `budget`.

    Full-K (W^T read from HBM exactly once, staying resident across the inner M
    loop) is preferred; K-tiling is used only when it wins on estimated HBM
    traffic (very large in_features that would otherwise force a tiny tn).
    """
    def footprint(tk, tn):
        fixed = (2 * tm * tk * c_bytes            # x tile (double buffer)
                 + 2 * tk * r_pad * c_bytes       # lora_A tile
                 + tm * r_pad * 4)                # x@A f32 accumulator scratch
        per_col = (2 * tk * c_bytes               # W^T tile
                   + 2 * 4                        # bias (f32)
                   + 2 * r_pad * c_bytes          # scaled lora_B tile
                   + 2 * tm * o_bytes             # output tile
                   + tm * 4)                      # f32 accumulator scratch
        return fixed + per_col * tn, fixed, per_col

    def traffic(tk, tn):
        n_n = N_pad // tn
        n_m = M_pad // tm
        nk = K_pad // tk
        w_reads = n_m if nk > 1 else 1
        a_reads = n_m * n_n if nk > 1 else 1
        return (M_pad * K_pad * n_n + K_pad * N_pad * w_reads
                + K_pad * r_pad * a_reads + r_pad * N_pad) * c_bytes

    best = None  # (sort_key, tk, tn)
    tk = K_pad
    while tk >= 128:
        if K_pad % tk == 0:
            _, fixed, per_col = footprint(tk, 0)
            cap_cols = (budget - fixed) // per_col if budget > fixed else 0
            tn = _pick_tn(cap_cols, N_pad)
            if tn >= 128:
                key = (traffic(tk, tn), -tk)      # prefer larger tk on ties
                if best is None or key < best[0]:
                    best = (key, tk, tn)
        tk -= 128
    if best is None:
        tk, tn = 128, min(N_pad, 128)             # last resort (tiny budget)
    else:
        tk, tn = best[1], best[2]
    return tk, tn, footprint(tk, tn)[0]


# ---------------------------------------------------------------------------
# Kernel
# ---------------------------------------------------------------------------
def _lora_linear_kernel(x_ref, w_ref, bias_ref, a_ref, b_ref, o_ref,
                        acc_ref, xa_ref):
    """One (tm x tn) output tile, accumulated over the K (in_features) axis.

    x_ref    : (tm, tk)     compute dtype
    w_ref    : (tk, tn)     compute dtype (base weight, transposed, zero-padded)
    bias_ref : (1,  tn)     float32
    a_ref    : (tk, r_pad)  compute dtype (lora_A, zero-padded)
    b_ref    : (r_pad, tn)  compute dtype (scaling * lora_B, zero-padded)
    o_ref    : (tm, tn)     output dtype
    acc_ref  : (tm, tn)     f32 scratch  — base + LoRA accumulator
    xa_ref   : (tm, r_pad)  f32 scratch  — x @ lora_A accumulator
    """
    k = pl.program_id(2)

    @pl.when(k == 0)
    def _init():
        acc_ref[...] = jnp.zeros_like(acc_ref)
        xa_ref[...] = jnp.zeros_like(xa_ref)

    x = x_ref[...]
    acc_ref[...] += jnp.dot(x, w_ref[...], preferred_element_type=jnp.float32)
    xa_ref[...] += jnp.dot(x, a_ref[...], preferred_element_type=jnp.float32)

    @pl.when(k == pl.num_programs(2) - 1)
    def _finalize():
        acc = acc_ref[...]
        acc += jnp.dot(xa_ref[...].astype(b_ref.dtype), b_ref[...],
                       preferred_element_type=jnp.float32)
        acc += bias_ref[...]                       # f32 epilogue
        o_ref[...] = acc.astype(o_ref.dtype)


# ---------------------------------------------------------------------------
# Parameter preparation (one-time; cache the result across forward calls)
# ---------------------------------------------------------------------------
class LoRALinearParams(NamedTuple):
    w_t: jax.Array          # (K_pad, N_pad)  compute dtype, zero-padded W^T
    bias: jax.Array         # (1, N_pad)      float32, zero-padded
    lora_a: jax.Array       # (K_pad, r_pad)  compute dtype, zero-padded
    lora_b: jax.Array       # (r_pad, N_pad)  compute dtype, scaling folded in
    in_features: int
    out_features: int


def prepare_lora_linear(weight, bias, lora_A, lora_B, scaling, *,
                        compute_dtype=jnp.float32):
    """Pre-cast / pre-pad the static operands once (do NOT redo per forward)."""
    out_features, in_features = weight.shape
    rank = lora_A.shape[1]
    if bias is None:
        bias = jnp.zeros((out_features,), jnp.float32)

    K_pad = _round_up(in_features, 128)
    N_pad = _round_up(out_features, 128)
    r_pad = _round_up(rank, 128)

    w_t = jnp.pad(weight.T.astype(compute_dtype),
                  ((0, K_pad - in_features), (0, N_pad - out_features)))
    a_p = jnp.pad(lora_A.astype(compute_dtype),
                  ((0, K_pad - in_features), (0, r_pad - rank)))
    b_scaled = (jnp.asarray(scaling, jnp.float32)
                * lora_B.astype(jnp.float32)).astype(compute_dtype)
    b_p = jnp.pad(b_scaled, ((0, r_pad - rank), (0, N_pad - out_features)))
    bias_p = jnp.pad(bias.astype(jnp.float32),
                     (0, N_pad - out_features)).reshape(1, N_pad)
    return LoRALinearParams(w_t, bias_p, a_p, b_p,
                            int(in_features), int(out_features))


# ---------------------------------------------------------------------------
# Forward
# ---------------------------------------------------------------------------
def lora_linear_apply(x, params: LoRALinearParams, *, tm_target=256):
    """LoRALinear forward with prepared params.  x: (..., in) -> (..., out)."""
    in_features, out_features = params.in_features, params.out_features
    K_pad, N_pad = params.w_t.shape
    r_pad = params.lora_a.shape[1]
    compute_dtype = params.w_t.dtype
    out_dtype = x.dtype
    c = jnp.dtype(compute_dtype).itemsize
    o = jnp.dtype(out_dtype).itemsize

    lead_shape = x.shape[:-1]
    xf = x.reshape(-1, in_features)
    M = xf.shape[0]

    # ---- Row (M) tiling: multiple of 8, balanced tiles of <= tm_target rows. ----
    M8 = _round_up(max(M, 1), 8)
    n_m = _cdiv(M8, tm_target)
    tm = _round_up(_cdiv(M8, n_m), 8)
    M_pad = tm * n_m

    xf = xf.astype(compute_dtype)
    if M_pad != M or K_pad != in_features:
        xf = jnp.pad(xf, ((0, M_pad - M), (0, K_pad - in_features)))

    # ---- Generation-aware VMEM budget / tile selection (grow tn first). ----
    cap = _vmem_capacity_bytes()
    budget = cap // 3                                    # ~21 MiB v7x, ~42 MiB v5e/v6e
    tk, tn, ws = _select_tiles(M_pad, tm, K_pad, N_pad, r_pad, c, o, budget)

    # Guarantee >= 2 tiles along a "parallel" axis (keeps both v7x cores busy).
    if M_pad // tm == 1 and N_pad // tn == 1 and N_pad % 256 == 0:
        tn //= 2

    nk = K_pad // tk
    n_n = N_pad // tn
    grid = (n_n, M_pad // tm, nk)                        # N, M parallel; K arbitrary

    vmem_limit = max(32 << 20, min(int(cap * 0.85), cap - (12 << 20)))
    vmem_limit = int(max(vmem_limit, min(int(cap * 0.95), ws + (8 << 20))))

    # ---- Cost estimate (counts x re-fetches; W/A re-fetches when K-tiled). ----
    w_reads = (M_pad // tm) if nk > 1 else 1
    a_reads = (M_pad // tm) * n_n if nk > 1 else 1
    cost = pl.CostEstimate(
        flops=2 * M_pad * (K_pad * N_pad + K_pad * r_pad + r_pad * N_pad),
        transcendentals=0,
        bytes_accessed=int(M_pad * K_pad * c * n_n
                           + K_pad * N_pad * c * w_reads
                           + K_pad * r_pad * c * a_reads
                           + r_pad * N_pad * c
                           + N_pad * 4
                           + M_pad * N_pad * o),
    )

    out = pl.pallas_call(
        _lora_linear_kernel,
        out_shape=jax.ShapeDtypeStruct((M_pad, N_pad), out_dtype),
        grid_spec=pltpu.PrefetchScalarGridSpec(
            num_scalar_prefetch=0,
            grid=grid,
            in_specs=[
                pl.BlockSpec((tm, tk), lambda j, i, k: (i, k)),       # x rows
                pl.BlockSpec((tk, tn), lambda j, i, k: (k, j)),       # W^T slab
                pl.BlockSpec((1, tn), lambda j, i, k: (0, j)),        # bias slab
                pl.BlockSpec((tk, r_pad), lambda j, i, k: (k, 0)),    # lora_A
                pl.BlockSpec((r_pad, tn), lambda j, i, k: (0, j)),    # scaled lora_B
            ],
            out_specs=pl.BlockSpec((tm, tn), lambda j, i, k: (i, j)),
            scratch_shapes=[
                pltpu.VMEM((tm, tn), jnp.float32),      # base+LoRA accumulator
                pltpu.VMEM((tm, r_pad), jnp.float32),   # x @ lora_A accumulator
            ],
        ),
        compiler_params=pltpu.CompilerParams(
            dimension_semantics=("parallel", "parallel", "arbitrary"),
            vmem_limit_bytes=vmem_limit,
        ),
        cost_estimate=cost,
    )(xf, params.w_t, params.bias, params.lora_a, params.lora_b)

    out = out[:M, :out_features]
    return out.reshape(*lead_shape, out_features)


def lora_linear(x, weight, bias, lora_A, lora_B, scaling, *, compute_dtype=None):
    """One-shot convenience wrapper.  For repeated forwards, call
    `prepare_lora_linear` once and reuse the result with `lora_linear_apply`
    (avoids re-reading / re-casting the full weight matrix every call)."""
    if compute_dtype is None:
        compute_dtype = x.dtype
    params = prepare_lora_linear(weight, bias, lora_A, lora_B, scaling,
                                 compute_dtype=compute_dtype)
    return lora_linear_apply(x, params)


if __name__ == "__main__":
    # Small shapes consistent with a GLUE-style linear layer.
    batch, seq = 2, 8
    in_features, out_features = 32, 32
    rank, alpha = 8, 16
    scaling = alpha / rank

    key = jax.random.PRNGKey(0)
    kx, kw, kb, ka, klb = jax.random.split(key, 5)

    x = jax.random.normal(kx, (batch, seq, in_features), dtype=jnp.float32)

    # Base nn.Linear params: weight (out, in), bias (out,).
    weight = jax.random.normal(kw, (out_features, in_features), dtype=jnp.float32) * 0.1
    bias = jax.random.normal(kb, (out_features,), dtype=jnp.float32) * 0.1

    # LoRA params. Module init: lora_A ~ kaiming_uniform(a=sqrt(5)), lora_B = 0.
    # lora_B is drawn randomly here so the LoRA branch is actually exercised.
    a_bound = 1.0 / math.sqrt(rank)
    lora_A = jax.random.uniform(ka, (in_features, rank), jnp.float32,
                                minval=-a_bound, maxval=a_bound)
    lora_B = jax.random.normal(klb, (rank, out_features), dtype=jnp.float32) * 0.05

    # --- f32 path (module semantics; tolerance covers MXU default precision) ---
    params_f32 = prepare_lora_linear(weight, bias, lora_A, lora_B, scaling,
                                     compute_dtype=jnp.float32)
    y = jax.block_until_ready(lora_linear_apply(x, params_f32))
    y_ref = x @ weight.T + bias + scaling * ((x @ lora_A) @ lora_B)
    assert y.shape == (batch, seq, out_features)
    assert jnp.allclose(y, y_ref, atol=1e-2, rtol=1e-2), "f32 mismatch vs reference"

    # --- bf16 MXU path (fast path on v6e/v7x), f32 accumulation ---
    params_bf16 = prepare_lora_linear(weight, bias, lora_A, lora_B, scaling,
                                      compute_dtype=jnp.bfloat16)
    y_bf = jax.block_until_ready(lora_linear_apply(x, params_bf16))
    xb = x.astype(jnp.bfloat16).astype(jnp.float32)
    wb = weight.T.astype(jnp.bfloat16).astype(jnp.float32)
    ab = lora_A.astype(jnp.bfloat16).astype(jnp.float32)
    bb = (scaling * lora_B).astype(jnp.bfloat16).astype(jnp.float32)
    xab = (xb @ ab).astype(jnp.bfloat16).astype(jnp.float32)
    y_bf_ref = xb @ wb + bias + xab @ bb
    assert jnp.allclose(y_bf, y_bf_ref, atol=5e-2, rtol=5e-2), "bf16 mismatch vs reference"

    print("KERNEL_OK")
</pallas_src>

<mosaic_0001>
module attributes {stable_mosaic.version = 11 : i64} {
  func.func @_lora_linear_kernel(%arg0: i32, %arg1: i32, %arg2: i32, %arg3: memref<16x128xf32, #tpu.memory_space<vmem>>, %arg4: memref<128x128xf32, #tpu.memory_space<vmem>>, %arg5: memref<1x128xf32, #tpu.memory_space<vmem>>, %arg6: memref<128x128xf32, #tpu.memory_space<vmem>>, %arg7: memref<128x128xf32, #tpu.memory_space<vmem>>, %arg8: memref<16x128xf32, #tpu.memory_space<vmem>>, %arg9: memref<16x128xf32, #tpu.memory_space<vmem>>, %arg10: memref<16x128xf32, #tpu.memory_space<vmem>>) attributes {dimension_semantics = [#tpu.dimension_semantics<parallel>, #tpu.dimension_semantics<parallel>, #tpu.dimension_semantics<arbitrary>], iteration_bounds = array<i64: 1, 1, 1>, scalar_prefetch = 0 : i64, scratch_operands = 2 : i64, tpu.core_type = #tpu.core_type<tc>, window_params = [{transform_indices = @transform_0, window_bounds = array<i64: 16, 128>}, {transform_indices = @transform_1, window_bounds = array<i64: 128, 128>}, {transform_indices = @transform_2, window_bounds = array<i64: 1, 128>}, {transform_indices = @transform_3, window_bounds = array<i64: 128, 128>}, {transform_indices = @transform_4, window_bounds = array<i64: 128, 128>}, {transform_indices = @transform_5, window_bounds = array<i64: 16, 128>}]} {
    %c0_i32 = arith.constant 0 : i32
    %0 = arith.cmpi eq, %arg2, %c0_i32 : i32
    %1 = arith.extui %0 : i1 to i32
    %c0_i32_0 = arith.constant 0 : i32
    %2 = arith.cmpi ne, %1, %c0_i32_0 : i32
    scf.if %2 {
      %cst_17 = arith.constant 0.000000e+00 : f32
      %17 = vector.broadcast %cst_17 : f32 to vector<16x128xf32>
      %c0_18 = arith.constant 0 : index
      %c0_19 = arith.constant 0 : index
      %18 = vector.load %arg9[%c0_18, %c0_19] : memref<16x128xf32, #tpu.memory_space<vmem>>, vector<16x128xf32>
      tpu.vector_store %arg9[%c0_18, %c0_19], %17 {strides = array<i32>} : memref<16x128xf32, #tpu.memory_space<vmem>>, vector<16x128xf32>,
      %cst_20 = arith.constant 0.000000e+00 : f32
      %19 = vector.broadcast %cst_20 : f32 to vector<16x128xf32>
      %c0_21 = arith.constant 0 : index
      %c0_22 = arith.constant 0 : index
      %20 = vector.load %arg10[%c0_21, %c0_22] : memref<16x128xf32, #tpu.memory_space<vmem>>, vector<16x128xf32>
      tpu.vector_store %arg10[%c0_21, %c0_22], %19 {strides = array<i32>} : memref<16x128xf32, #tpu.memory_space<vmem>>, vector<16x128xf32>,
    } else {
    }
    %c0 = arith.constant 0 : index
    %c0_1 = arith.constant 0 : index
    %3 = vector.load %arg3[%c0, %c0_1] : memref<16x128xf32, #tpu.memory_space<vmem>>, vector<16x128xf32>
    %c0_2 = arith.constant 0 : index
    %c0_3 = arith.constant 0 : index
    %4 = vector.load %arg9[%c0_2, %c0_3] : memref<16x128xf32, #tpu.memory_space<vmem>>, vector<16x128xf32>
    %c0_4 = arith.constant 0 : index
    %c0_5 = arith.constant 0 : index
    %5 = vector.load %arg4[%c0_4, %c0_5] : memref<128x128xf32, #tpu.memory_space<vmem>>, vector<128x128xf32>
    %cst = arith.constant dense<0.000000e+00> : vector<16x128xf32>
    %6 = tpu.matmul %3, %5, %cst {dimension_numbers = #tpu.dot_dimension_numbers<[1], [0], [0], [1], [0, 0, 1, 1], [], []>} : vector<16x128xf32>, vector<128x128xf32>, vector<16x128xf32> -> vector<16x128xf32>
    %7 = arith.addf %4, %6 : vector<16x128xf32>
    %c0_6 = arith.constant 0 : index
    %c0_7 = arith.constant 0 : index
    %8 = vector.load %arg9[%c0_6, %c0_7] : memref<16x128xf32, #tpu.memory_space<vmem>>, vector<16x128xf32>
    tpu.vector_store %arg9[%c0_6, %c0_7], %7 {strides = array<i32>} : memref<16x128xf32, #tpu.memory_space<vmem>>, vector<16x128xf32>,
    %c0_8 = arith.constant 0 : index
    %c0_9 = arith.constant 0 : index
    %9 = vector.load %arg10[%c0_8, %c0_9] : memref<16x128xf32, #tpu.memory_space<vmem>>, vector<16x128xf32>
    %c0_10 = arith.constant 0 : index
    %c0_11 = arith.constant 0 : index
    %10 = vector.load %arg6[%c0_10, %c0_11] : memref<128x128xf32, #tpu.memory_space<vmem>>, vector<128x128xf32>
    %cst_12 = arith.constant dense<0.000000e+00> : vector<16x128xf32>
    %11 = tpu.matmul %3, %10, %cst_12 {dimension_numbers = #tpu.dot_dimension_numbers<[1], [0], [0], [1], [0, 0, 1, 1], [], []>} : vector<16x128xf32>, vector<128x128xf32>, vector<16x128xf32> -> vector<16x128xf32>
    %12 = arith.addf %9, %11 : vector<16x128xf32>
    %c0_13 = arith.constant 0 : index
    %c0_14 = arith.constant 0 : index
    %13 = vector.load %arg10[%c0_13, %c0_14] : memref<16x128xf32, #tpu.memory_space<vmem>>, vector<16x128xf32>
    tpu.vector_store %arg10[%c0_13, %c0_14], %12 {strides = array<i32>} : memref<16x128xf32, #tpu.memory_space<vmem>>, vector<16x128xf32>,
    %c0_i32_15 = arith.constant 0 : i32
    %14 = arith.cmpi eq, %arg2, %c0_i32_15 : i32
    %15 = arith.extui %14 : i1 to i32
    %c0_i32_16 = arith.constant 0 : i32
    %16 = arith.cmpi ne, %15, %c0_i32_16 : i32
    scf.if %16 {
      %c0_17 = arith.constant 0 : index
      %c0_18 = arith.constant 0 : index
      %17 = vector.load %arg9[%c0_17, %c0_18] : memref<16x128xf32, #tpu.memory_space<vmem>>, vector<16x128xf32>
      %c0_19 = arith.constant 0 : index
      %c0_20 = arith.constant 0 : index
      %18 = vector.load %arg10[%c0_19, %c0_20] : memref<16x128xf32, #tpu.memory_space<vmem>>, vector<16x128xf32>
      %c0_21 = arith.constant 0 : index
      %c0_22 = arith.constant 0 : index
      %19 = vector.load %arg7[%c0_21, %c0_22] : memref<128x128xf32, #tpu.memory_space<vmem>>, vector<128x128xf32>
      %cst_23 = arith.constant dense<0.000000e+00> : vector<16x128xf32>
      %20 = tpu.matmul %18, %19, %cst_23 {dimension_numbers = #tpu.dot_dimension_numbers<[1], [0], [0], [1], [0, 0, 1, 1], [], []>} : vector<16x128xf32>, vector<128x128xf32>, vector<16x128xf32> -> vector<16x128xf32>
      %21 = arith.addf %17, %20 : vector<16x128xf32>
      %c0_24 = arith.constant 0 : index
      %c0_25 = arith.constant 0 : index
      %22 = vector.load %arg5[%c0_24, %c0_25] : memref<1x128xf32, #tpu.memory_space<vmem>>, vector<1x128xf32>
      %23 = vector.broadcast %22 : vector<1x128xf32> to vector<16x128xf32>
      %24 = arith.addf %21, %23 : vector<16x128xf32>
      %c0_26 = arith.constant 0 : index
      %c0_27 = arith.constant 0 : index
      %25 = vector.load %arg8[%c0_26, %c0_27] : memref<16x128xf32, #tpu.memory_space<vmem>>, vector<16x128xf32>
      tpu.vector_store %arg8[%c0_26, %c0_27], %24 {strides = array<i32>} : memref<16x128xf32, #tpu.memory_space<vmem>>, vector<16x128xf32>,
    } else {
    }
    return
  }
  func.func @transform_0(%arg0: i32, %arg1: i32, %arg2: i32) -> (i32, i32) {
    %c0_i32 = arith.constant 0 : i32
    return %arg1, %arg2 : i32, i32
  }
  func.func @transform_1(%arg0: i32, %arg1: i32, %arg2: i32) -> (i32, i32) {
    %c0_i32 = arith.constant 0 : i32
    return %arg2, %arg0 : i32, i32
  }
  func.func @transform_2(%arg0: i32, %arg1: i32, %arg2: i32) -> (i32, i32) {
    %c0_i32 = arith.constant 0 : i32
    %c0_i32_0 = arith.constant 0 : i32
    return %c0_i32, %arg0 : i32, i32
  }
  func.func @transform_3(%arg0: i32, %arg1: i32, %arg2: i32) -> (i32, i32) {
    %c0_i32 = arith.constant 0 : i32
    %c0_i32_0 = arith.constant 0 : i32
    return %arg2, %c0_i32 : i32, i32
  }
  func.func @transform_4(%arg0: i32, %arg1: i32, %arg2: i32) -> (i32, i32) {
    %c0_i32 = arith.constant 0 : i32
    %c0_i32_0 = arith.constant 0 : i32
    return %c0_i32, %arg0 : i32, i32
  }
  func.func @transform_5(%arg0: i32, %arg1: i32, %arg2: i32) -> (i32, i32) {
    %c0_i32 = arith.constant 0 : i32
    return %arg1, %arg0 : i32, i32
  }
}

</mosaic_0001>

<llo_original>
// kernel: tpu_custom_call.1
$region0: #{tpu_custom_call.1}
  #allocation0 [shape = 'u32[]', space=smem, size = 0x4, offset = 0x4, fixed_abs, tag = 'smem constant byte address 0x4 - core index']
  #allocation1 [shape = 'u32[72,128]{1,0:T(1,128)}', space=vmem, size = 0x9000, scoped, tag = 'internal scratch']
  #allocation2 [shape = 'f32[16,128]{1,0:T(8,128)}', space=vmem, size = 0x2000, scoped, tag = 'scratch operand']
  #allocation3 [shape = 'f32[16,128]{1,0:T(8,128)}', space=vmem, size = 0x2000, scoped, tag = 'scratch operand']
  %s0 = inlined_call_operand.hbm [shape: f32[16,128], index: 0, kind: input, shape index: {}]
  %s1 = inlined_call_operand.hbm [shape: f32[128,128], index: 1, kind: input, shape index: {}]
  %s2 = inlined_call_operand.vmem [shape: f32[1,128], index: 2, kind: input, shape index: {}]
  %s3 = inlined_call_operand.hbm [shape: f32[128,128], index: 3, kind: input, shape index: {}]
  %s4 = inlined_call_operand.hbm [shape: f32[128,128], index: 4, kind: input, shape index: {}]
  %s5 = inlined_call_operand.hbm [shape: f32[16,128], index: 5, kind: output, shape index: {}]
  %s6 = sld [smem:[#allocation0]]
  $region54: #{tpu_custom_call.1} parent=0
    _
  %s8 = ssub.s32 1, %s6
  %s9 = scalar_select 0, %s8, %s6
  $region1: #{tpu_custom_call.1} parent=0
    #allocation4 [shape = 'u8[8192]{0}', space=vmem, size = 0x2000, scoped, tag = 'input window, operand 0, single buffered']
    #allocation5 [shape = 's32[1]{0}', space=sflag, size = 0x4, scoped, tag = 'scoped memory for tpu_custom_call.1']
    #allocation6 [shape = 's32[1]{0}', space=sflag, size = 0x4, scoped, tag = 'scoped memory for tpu_custom_call.1']
    #allocation7 [shape = 'u8[65536]{0}', space=vmem, size = 0x10000, scoped, tag = 'input window, operand 1, single buffered']
    #allocation8 [shape = 's32[1]{0}', space=sflag, size = 0x4, scoped, tag = 'scoped memory for tpu_custom_call.1']
    #allocation9 [shape = 'u8[65536]{0}', space=vmem, size = 0x10000, scoped, tag = 'input window, operand 3, single buffered']
    #allocation10 [shape = 'u8[65536]{0}', space=vmem, size = 0x10000, scoped, tag = 'input window, operand 4, single buffered']
    #allocation11 [shape = 's32[1]{0}', space=sflag, size = 0x4, scoped, tag = 'scoped memory for tpu_custom_call.1']
    #allocation12 [shape = 'u8[8192]{0}', space=vmem, size = 0x2000, scoped, tag = 'output window, operand 0, single buffered']
    %10 = vsyncpa [#allocation5], 0
    %11 = vsyncpa [#allocation8], 0
    %12 = vsyncpa [#allocation11], 0
    %13 = vsyncpa [#allocation6], 0
    // Predicated region
    $region2: #{tpu_custom_call.1} parent=1 // pred_check
      _
    $region3: #{tpu_custom_call.1} parent=1 // pred_check_branch
      %15 = sbr.rel (0) target = $region5
    $region4: #{tpu_custom_call.1} parent=1 // pred_region
      %17 = vsyncadd [#allocation5], 0
      %s18 = sshll.u32 %s0, 4
      %s19 = int_to_ptr.hbm [resolvable:$true] %s18
      %s20 = sshll.u32 [#allocation4], 4
      %s21 = int_to_ptr.vmem [resolvable:$true] %s20
      %26 = dma.hbm_to_vmem [thread:$0]  %s19, 256, %s21, [#allocation5], 128, 128, 8
    $region5: #{tpu_custom_call.1} parent=1 // pred_fallthru
      _
    // Predicated region
    $region6: #{tpu_custom_call.1} parent=1 // pred_check
      _
    $region7: #{tpu_custom_call.1} parent=1 // pred_check_branch
      %28 = sbr.rel (0) target = $region9
    $region8: #{tpu_custom_call.1} parent=1 // pred_region
      %30 = vsyncadd [#allocation8], 0
      %s31 = sshll.u32 %s1, 4
      %s32 = int_to_ptr.hbm [resolvable:$true] %s31
      %s33 = sshll.u32 [#allocation7], 4
      %s34 = int_to_ptr.vmem [resolvable:$true] %s33
      %39 = dma.hbm_to_vmem [thread:$0]  %s32, 2048, %s34, [#allocation8], 128, 128, 8
    $region9: #{tpu_custom_call.1} parent=1 // pred_fallthru
      _
    // Predicated region
    $region10: #{tpu_custom_call.1} parent=1 // pred_check
      _
    $region11: #{tpu_custom_call.1} parent=1 // pred_check_branch
      %41 = sbr.rel (0) target = $region13
    $region12: #{tpu_custom_call.1} parent=1 // pred_region
      _
    $region13: #{tpu_custom_call.1} parent=1 // pred_fallthru
      _
    // Predicated region
    $region14: #{tpu_custom_call.1} parent=1 // pred_check
      _
    $region15: #{tpu_custom_call.1} parent=1 // pred_check_branch
      %43 = sbr.rel (0) target = $region17
    $region16: #{tpu_custom_call.1} parent=1 // pred_region
      %45 = vsyncadd [#allocation8], 0
      %s46 = sshll.u32 %s3, 4
      %s47 = int_to_ptr.hbm [resolvable:$true] %s46
      %s48 = sshll.u32 [#allocation9], 4
      %s49 = int_to_ptr.vmem [resolvable:$true] %s48
      %54 = dma.hbm_to_vmem [thread:$0]  %s47, 2048, %s49, [#allocation8], 128, 128, 8
    $region17: #{tpu_custom_call.1} parent=1 // pred_fallthru
      _
    // Predicated region
    $region18: #{tpu_custom_call.1} parent=1 // pred_check
      _
    $region19: #{tpu_custom_call.1} parent=1 // pred_check_branch
      %56 = sbr.rel (0) target = $region21
    $region20: #{tpu_custom_call.1} parent=1 // pred_region
      %58 = vsyncadd [#allocation11], 0
      %s59 = sshll.u32 %s4, 4
      %s60 = int_to_ptr.hbm [resolvable:$true] %s59
      %s61 = sshll.u32 [#allocation10], 4
      %s62 = int_to_ptr.vmem [resolvable:$true] %s61
      %67 = dma.hbm_to_vmem [thread:$0]  %s60, 2048, %s62, [#allocation11], 128, 128, 8
    $region21: #{tpu_custom_call.1} parent=1 // pred_fallthru
      _
    // Predicated region
    $region22: #{tpu_custom_call.1} parent=1 // pred_check
      _
    $region23: #{tpu_custom_call.1} parent=1 // pred_check_branch
      %69 = sbr.rel (0) target = $region25
    $region24: #{tpu_custom_call.1} parent=1 // pred_region
      %71 = dma.done [#allocation5], 256
    $region25: #{tpu_custom_call.1} parent=1 // pred_fallthru
      _
    // Predicated region
    $region26: #{tpu_custom_call.1} parent=1 // pred_check
      _
    $region27: #{tpu_custom_call.1} parent=1 // pred_check_branch
      %73 = sbr.rel (0) target = $region29
    $region28: #{tpu_custom_call.1} parent=1 // pred_region
      %75 = dma.done [#allocation8], 2048
    $region29: #{tpu_custom_call.1} parent=1 // pred_fallthru
      _
    // Predicated region
    $region30: #{tpu_custom_call.1} parent=1 // pred_check
      _
    $region31: #{tpu_custom_call.1} parent=1 // pred_check_branch
      %77 = sbr.rel (0) target = $region33
    $region32: #{tpu_custom_call.1} parent=1 // pred_region
      %79 = dma.done [#allocation8], 2048
    $region33: #{tpu_custom_call.1} parent=1 // pred_fallthru
      _
    // Predicated region
    $region34: #{tpu_custom_call.1} parent=1 // pred_check
      _
    $region35: #{tpu_custom_call.1} parent=1 // pred_check_branch
      %81 = sbr.rel (0) target = $region37
    $region36: #{tpu_custom_call.1} parent=1 // pred_region
      %83 = dma.done [#allocation11], 2048
    $region37: #{tpu_custom_call.1} parent=1 // pred_fallthru
      _
    %p84 = scmp.eq.s32.totalorder 0, 0
    // Predicated region
    $region38: #{tpu_custom_call.1} parent=1 // pred_check
      %p85 = pneg %p84
    $region39: #{tpu_custom_call.1} parent=1 // pred_check_branch
      %87 = sbr.rel (%p85) target = $region41
    $region40: #{tpu_custom_call.1} parent=1 // pred_region
      %88 = vst [vmem:[#allocation2] sm:$0xff] 0.0
      %89 = vst [vmem:[#allocation2 + $0x8] sm:$0xff] 0.0
      %90 = vst [vmem:[#allocation3] sm:$0xff] 0.0
      %91 = vst [vmem:[#allocation3 + $0x8] sm:$0xff] 0.0
    $region41: #{tpu_custom_call.1} parent=1 // pred_fallthru
      _
    %v92 = vld [vmem:[#allocation4] sm:$0xff]
    %v93 = vld [vmem:[#allocation4 + $0x8] sm:$0xff]
    %v94 = vld [vmem:[#allocation2] sm:$0xff]
    %v95 = vld [vmem:[#allocation2 + $0x8] sm:$0xff]
    %v96 = vld [vmem:[#allocation7] sm:$0xff]
    %v97 = vld [vmem:[#allocation7 + $0x8] sm:$0xff]
    %v98 = vld [vmem:[#allocation7 + $0x10] sm:$0xff]
    %v99 = vld [vmem:[#allocation7 + $0x18] sm:$0xff]
    %v100 = vld [vmem:[#allocation7 + $0x20] sm:$0xff]
    %v101 = vld [vmem:[#allocation7 + $0x28] sm:$0xff]
    %v102 = vld [vmem:[#allocation7 + $0x30] sm:$0xff]
    %v103 = vld [vmem:[#allocation7 + $0x38] sm:$0xff]
    %v104 = vld [vmem:[#allocation7 + $0x40] sm:$0xff]
    %v105 = vld [vmem:[#allocation7 + $0x48] sm:$0xff]
    %v106 = vld [vmem:[#allocation7 + $0x50] sm:$0xff]
    %v107 = vld [vmem:[#allocation7 + $0x58] sm:$0xff]
    %v108 = vld [vmem:[#allocation7 + $0x60] sm:$0xff]
    %v109 = vld [vmem:[#allocation7 + $0x68] sm:$0xff]
    %v110 = vld [vmem:[#allocation7 + $0x70] sm:$0xff]
    %v111 = vld [vmem:[#allocation7 + $0x78] sm:$0xff]
    %112 = vmatpush.msra.mxu0 %v111
    %113 = vmatpush.msra.mxu0 %v110
    %114 = vmatpush.msra.mxu0 %v109
    %115 = vmatpush.msra.mxu0 %v108
    %116 = vmatpush.msra.mxu0 %v107
    %117 = vmatpush.msra.mxu0 %v106
    %118 = vmatpush.msra.mxu0 %v105
    %119 = vmatpush.msra.mxu0 %v104
    %120 = vmatpush.msra.mxu0 %v103
    %121 = vmatpush.msra.mxu0 %v102
    %122 = vmatpush.msra.mxu0 %v101
    %123 = vmatpush.msra.mxu0 %v100
    %124 = vmatpush.msra.mxu0 %v99
    %125 = vmatpush.msra.mxu0 %v98
    %126 = vmatpush.msra.mxu0 %v97
    %127 = vmatpush.msra.mxu0 %v96
    %128 = vmatmul.f32.gmra.mxu0 %v92
    %v129 = vpop.f32.mrf.mxu0
    %v130 = vadd.f32 0.0, %v129
    %131 = vmatmul.f32.gmra.mxu0 %v93
    %v132 = vpop.f32.mrf.mxu0
    %v133 = vadd.f32 0.0, %v132
    %134 = vdwg.mxu0
    %v135 = vadd.f32 %v94, %v130
    %v136 = vadd.f32 %v95, %v133
    %137 = vst [vmem:[#allocation2] sm:$0xff] %v135
    %138 = vst [vmem:[#allocation2 + $0x8] sm:$0xff] %v136
    %v139 = vld [vmem:[#allocation3] sm:$0xff]
    %v140 = vld [vmem:[#allocation3 + $0x8] sm:$0xff]
    %v141 = vld [vmem:[#allocation9] sm:$0xff]
    %v142 = vld [vmem:[#allocation9 + $0x8] sm:$0xff]
    %v143 = vld [vmem:[#allocation9 + $0x10] sm:$0xff]
    %v144 = vld [vmem:[#allocation9 + $0x18] sm:$0xff]
    %v145 = vld [vmem:[#allocation9 + $0x20] sm:$0xff]
    %v146 = vld [vmem:[#allocation9 + $0x28] sm:$0xff]
    %v147 = vld [vmem:[#allocation9 + $0x30] sm:$0xff]
    %v148 = vld [vmem:[#allocation9 + $0x38] sm:$0xff]
    %v149 = vld [vmem:[#allocation9 + $0x40] sm:$0xff]
    %v150 = vld [vmem:[#allocation9 + $0x48] sm:$0xff]
    %v151 = vld [vmem:[#allocation9 + $0x50] sm:$0xff]
    %v152 = vld [vmem:[#allocation9 + $0x58] sm:$0xff]
    %v153 = vld [vmem:[#allocation9 + $0x60] sm:$0xff]
    %v154 = vld [vmem:[#allocation9 + $0x68] sm:$0xff]
    %v155 = vld [vmem:[#allocation9 + $0x70] sm:$0xff]
    %v156 = vld [vmem:[#allocation9 + $0x78] sm:$0xff]
    %157 = vmatpush.msra.mxu0 %v156
    %158 = vmatpush.msra.mxu0 %v155
    %159 = vmatpush.msra.mxu0 %v154
    %160 = vmatpush.msra.mxu0 %v153
    %161 = vmatpush.msra.mxu0 %v152
    %162 = vmatpush.msra.mxu0 %v151
    %163 = vmatpush.msra.mxu0 %v150
    %164 = vmatpush.msra.mxu0 %v149
    %165 = vmatpush.msra.mxu0 %v148
    %166 = vmatpush.msra.mxu0 %v147
    %167 = vmatpush.msra.mxu0 %v146
    %168 = vmatpush.msra.mxu0 %v145
    %169 = vmatpush.msra.mxu0 %v144
    %170 = vmatpush.msra.mxu0 %v143
    %171 = vmatpush.msra.mxu0 %v142
    %172 = vmatpush.msra.mxu0 %v141
    %173 = vmatmul.f32.gmra.mxu0 %v92
    %v174 = vpop.f32.mrf.mxu0
    %v175 = vadd.f32 0.0, %v174
    %176 = vmatmul.f32.gmra.mxu0 %v93
    %v177 = vpop.f32.mrf.mxu0
    %v178 = vadd.f32 0.0, %v177
    %179 = vdwg.mxu0
    %v180 = vadd.f32 %v139, %v175
    %v181 = vadd.f32 %v140, %v178
    %182 = vst [vmem:[#allocation3] sm:$0xff] %v180
    %183 = vst [vmem:[#allocation3 + $0x8] sm:$0xff] %v181
    // Predicated region
    $region42: #{tpu_custom_call.1} parent=1 // pred_check
      %p184 = pneg %p84
    $region43: #{tpu_custom_call.1} parent=1 // pred_check_branch
      %186 = sbr.rel (%p184) target = $region45
    $region44: #{tpu_custom_call.1} parent=1 // pred_region
      %v187 = vld [vmem:[#allocation2] sm:$0xff]
      %v188 = vld [vmem:[#allocation2 + $0x8] sm:$0xff]
      %v189 = vld [vmem:[#allocation3] sm:$0xff]
      %v190 = vld [vmem:[#allocation3 + $0x8] sm:$0xff]
      %v191 = vld [vmem:[#allocation10] sm:$0xff]
      %v192 = vld [vmem:[#allocation10 + $0x8] sm:$0xff]
      %v193 = vld [vmem:[#allocation10 + $0x10] sm:$0xff]
      %v194 = vld [vmem:[#allocation10 + $0x18] sm:$0xff]
      %v195 = vld [vmem:[#allocation10 + $0x20] sm:$0xff]
      %v196 = vld [vmem:[#allocation10 + $0x28] sm:$0xff]
      %v197 = vld [vmem:[#allocation10 + $0x30] sm:$0xff]
      %v198 = vld [vmem:[#allocation10 + $0x38] sm:$0xff]
      %v199 = vld [vmem:[#allocation10 + $0x40] sm:$0xff]
      %v200 = vld [vmem:[#allocation10 + $0x48] sm:$0xff]
      %v201 = vld [vmem:[#allocation10 + $0x50] sm:$0xff]
      %v202 = vld [vmem:[#allocation10 + $0x58] sm:$0xff]
      %v203 = vld [vmem:[#allocation10 + $0x60] sm:$0xff]
      %v204 = vld [vmem:[#allocation10 + $0x68] sm:$0xff]
      %v205 = vld [vmem:[#allocation10 + $0x70] sm:$0xff]
      %v206 = vld [vmem:[#allocation10 + $0x78] sm:$0xff]
      %207 = vmatpush.msra.mxu0 %v206
      %208 = vmatpush.msra.mxu0 %v205
      %209 = vmatpush.msra.mxu0 %v204
      %210 = vmatpush.msra.mxu0 %v203
      %211 = vmatpush.msra.mxu0 %v202
      %212 = vmatpush.msra.mxu0 %v201
      %213 = vmatpush.msra.mxu0 %v200
      %214 = vmatpush.msra.mxu0 %v199
      %215 = vmatpush.msra.mxu0 %v198
      %216 = vmatpush.msra.mxu0 %v197
      %217 = vmatpush.msra.mxu0 %v196
      %218 = vmatpush.msra.mxu0 %v195
      %219 = vmatpush.msra.mxu0 %v194
      %220 = vmatpush.msra.mxu0 %v193
      %221 = vmatpush.msra.mxu0 %v192
      %222 = vmatpush.msra.mxu0 %v191
      %223 = vmatmul.f32.gmra.mxu0 %v189
      %v224 = vpop.f32.mrf.mxu0
      %v225 = vadd.f32 0.0, %v224
      %226 = vmatmul.f32.gmra.mxu0 %v190
      %v227 = vpop.f32.mrf.mxu0
      %v228 = vadd.f32 0.0, %v227
      %229 = vdwg.mxu0
      %v230 = vadd.f32 %v187, %v225
      %v231 = vadd.f32 %v188, %v228
      %v232 = vld [vmem:[%s2] sm:$0x1]
      %v234 = vperm.slane %v232, 0
      %v236 = vadd.f32 %v230, %v234
      %v237 = vadd.f32 %v231, %v234
      %238 = vst [vmem:[#allocation12] sm:$0xff] %v236
      %239 = vst [vmem:[#allocation12 + $0x8] sm:$0xff] %v237
    $region45: #{tpu_custom_call.1} parent=1 // pred_fallthru
      _
    // Predicated region
    $region46: #{tpu_custom_call.1} parent=1 // pred_check
      _
    $region47: #{tpu_custom_call.1} parent=1 // pred_check_branch
      %241 = sbr.rel (0) target = $region49
    $region48: #{tpu_custom_call.1} parent=1 // pred_region
      %243 = vsyncadd [#allocation6], 0
      %s244 = sshll.u32 [#allocation12], 4
      %s245 = int_to_ptr.vmem [resolvable:$true] %s244
      %s246 = sshll.u32 %s5, 4
      %s247 = int_to_ptr.hbm [resolvable:$true] %s246
      %252 = dma.vmem_to_hbm [thread:$0]  %s245, 256, %s247, [#allocation6], 128, 128, 8
    $region49: #{tpu_custom_call.1} parent=1 // pred_fallthru
      _
    // Predicated region
    $region50: #{tpu_custom_call.1} parent=1 // pred_check
      _
    $region51: #{tpu_custom_call.1} parent=1 // pred_check_branch
      %254 = sbr.rel (0) target = $region53
    $region52: #{tpu_custom_call.1} parent=1 // pred_region
      %256 = dma.done [#allocation6], 256
    $region53: #{tpu_custom_call.1} parent=1 // pred_fallthru
      _
    %257 = vsyncpa [#allocation5], 1
    %258 = vsyncpa [#allocation8], 1
    %259 = vsyncpa [#allocation11], 1
    %260 = vsyncpa [#allocation6], 1

</llo_original>
